<compile_context>
chip_gen: v6e
topology: v6e:2x2x1
jax: 0.10.0
libtpu: 0.0.40
codegen_flags: <defaults>
</compile_context>

<pallas_src>
import jax
import jax.numpy as jnp
from jax.experimental import pallas as pl
from jax.experimental.pallas import tpu as pltpu


def _round_up(v, m):
    return ((v + m - 1) // m) * m


def _make_kernel(compute_dtype, seq_len, kv_tile, mask_kv):
    approx_recip = compute_dtype != jnp.float32
    mask_value = -1e30  # large finite negative: exp underflows to 0, no inf-inf NaN

    def kernel(xq_ref, w_ref, xkv_ref, o_ref, xw_ref, m_ref, l_ref, acc_ref):
        ki = pl.program_id(2)

        # Init once per query tile: project (x @ W) into scratch and reset the
        # online-softmax state. Reused for every kv step (hoisted).
        @pl.when(ki == 0)
        def _():
            xw_ref[...] = jnp.dot(
                xq_ref[...], w_ref[...],
                preferred_element_type=jnp.float32).astype(compute_dtype)
            m_ref[...] = jnp.full_like(m_ref, -jnp.inf)
            l_ref[...] = jnp.zeros_like(l_ref)
            acc_ref[...] = jnp.zeros_like(acc_ref)

        # kv tile is already in compute_dtype (cast in the wrapper): no per-step cast.
        kv = xkv_ref[...]                                   # (tk, Hp)

        # scores = (x @ W) @ kv^T, contracting the last dims of both operands
        # (no x.T materialized; TODO(synk): confirm via pl.lower_as_mlir that no
        # per-step XLU transpose of the kv tile is emitted).
        s = jax.lax.dot_general(
            xw_ref[...], kv, (((1,), (1,)), ((), ())),
            preferred_element_type=jnp.float32)             # (tq, tk) f32

        if mask_kv:
            col = ki * kv_tile + jax.lax.broadcasted_iota(jnp.int32, (1, kv_tile), 1)
            s = jnp.where(col < seq_len, s, mask_value)

        m_prev = m_ref[...]
        m_new = jnp.maximum(m_prev, jnp.max(s, axis=-1, keepdims=True))
        alpha = jnp.exp(m_prev - m_new)                     # f32 elementwise
        p = jnp.exp(s - m_new)                              # unnormalized probs, f32
        l_ref[...] = alpha * l_ref[...] + jnp.sum(p, axis=-1, keepdims=True)
        acc_ref[...] = alpha * acc_ref[...] + jnp.dot(
            p.astype(compute_dtype), kv, preferred_element_type=jnp.float32)
        m_ref[...] = m_new

        # Finalize: normalize the (tq, Hp) accumulator once (deferred normalization).
        @pl.when(ki == pl.num_programs(2) - 1)
        def _():
            inv_l = pl.reciprocal(l_ref[...], approx=approx_recip)
            o_ref[...] = (acc_ref[...] * inv_l).astype(o_ref.dtype)

    return kernel


def self_attention(x, w, *, tile=512, compute_dtype=jnp.bfloat16):
    """x: (B, S, H) f32, w: (H, H) f32 -> (B, S, H) f32.

    compute_dtype is the MXU operand dtype (bf16 recommended on v6e/v7x);
    softmax math and all accumulation stay in f32.
    """
    B, S, H = x.shape
    assert w.shape == (H, H)

    # Lane-dense padding: H up to a multiple of 128 (zero cols of x / zero
    # rows+cols of W leave scores and the first H output cols unchanged).
    Hp = _round_up(H, 128)
    # Tile / sequence padding: one tile size T for both q and kv axes, S padded
    # up to a multiple of T. Padded kv columns are masked inside the kernel;
    # padded query rows are sliced off the output. VMEM usage is bounded by T
    # for any S (no more "tile = S" blow-up for non-divisible S).
    T = _round_up(min(tile, _round_up(S, 8)), 8)
    Sp = _round_up(S, T)

    h_pad, s_pad = Hp - H, Sp - S
    x_p = jnp.pad(x, ((0, 0), (0, s_pad), (0, h_pad))) if (h_pad or s_pad) else x
    w_p = jnp.pad(w, ((0, h_pad), (0, h_pad))) if h_pad else w
    # Operands cast once here (halves kv HBM traffic & VMEM footprint for bf16).
    x_p = x_p.astype(compute_dtype)
    w_p = w_p.astype(compute_dtype)

    grid = (B, Sp // T, Sp // T)
    kernel = _make_kernel(compute_dtype, S, T, mask_kv=(s_pad != 0))

    out_p = pl.pallas_call(
        kernel,
        out_shape=jax.ShapeDtypeStruct((B, Sp, Hp), x.dtype),
        grid_spec=pltpu.PrefetchScalarGridSpec(
            num_scalar_prefetch=0,
            grid=grid,
            in_specs=[
                # query tile of x: block index constant along the inner kv axis
                # -> single buffer is enough.
                pl.BlockSpec((pl.Squeezed(), T, Hp), lambda b, qi, ki: (b, qi, 0),
                             pipeline_mode=pl.Buffered(1)),
                # full attention-weight matrix, resident across the whole grid.
                pl.BlockSpec((Hp, Hp), lambda b, qi, ki: (0, 0),
                             pipeline_mode=pl.Buffered(1)),
                # streamed key/value tile of x (default double-buffering).
                pl.BlockSpec((pl.Squeezed(), T, Hp), lambda b, qi, ki: (b, ki, 0)),
            ],
            out_specs=pl.BlockSpec((pl.Squeezed(), T, Hp), lambda b, qi, ki: (b, qi, 0)),
            scratch_shapes=[
                pltpu.VMEM((T, Hp), compute_dtype),   # xw = (x @ W) for this q tile
                pltpu.VMEM((T, 1), jnp.float32),      # running max m
                pltpu.VMEM((T, 1), jnp.float32),      # running denom l
                pltpu.VMEM((T, Hp), jnp.float32),     # unnormalized output accumulator
            ],
        ),
        compiler_params=pltpu.CompilerParams(
            # batch & query-tile axes shard across TensorCores; kv axis is the
            # sequential online-softmax reduction (kept last).
            dimension_semantics=("parallel", "parallel", "arbitrary"),
            # Above the 32 MiB default, still safe on v7x's 64 MiB physical VMEM;
            # actual footprint at T=512 is far below this.
            vmem_limit_bytes=48 * 1024 * 1024,
        ),
    )(x_p, w_p, x_p)

    if h_pad or s_pad:
        out_p = out_p[:, :S, :H]
    return out_p


def self_attention_ref(x, w):
    """Pure-f32 reference (matches the PyTorch module)."""
    scores = jnp.einsum("bsh,hk->bsk", x, w)
    scores = jnp.einsum("bsk,btk->bst", scores, x)
    attn = jax.nn.softmax(scores, axis=-1)
    return jnp.einsum("bst,bth->bsh", attn, x)


def self_attention_ref_mixed(x, w, compute_dtype=jnp.bfloat16):
    """Reference applying the same bf16-operand / f32-accumulate casts as the kernel."""
    xc = x.astype(compute_dtype)
    wc = w.astype(compute_dtype)
    xw = jnp.einsum("bsh,hk->bsk", xc, wc, preferred_element_type=jnp.float32)
    scores = jnp.einsum("bsk,btk->bst", xw.astype(compute_dtype), xc,
                        preferred_element_type=jnp.float32)
    attn = jax.nn.softmax(scores, axis=-1)
    out = jnp.einsum("bst,bth->bsh", attn.astype(compute_dtype), xc,
                     preferred_element_type=jnp.float32)
    return out.astype(x.dtype)


if __name__ == "__main__":
    key = jax.random.PRNGKey(0)
    k_x, k_w = jax.random.split(key)

    B, S, H = 2, 8, 32
    x = jax.random.normal(k_x, (B, S, H), dtype=jnp.float32)
    # deterministic init of nn.Parameter(torch.randn(hidden_dim, hidden_dim))
    w = jax.random.normal(k_w, (H, H), dtype=jnp.float32)

    # 1) f32-operand path: validates the kernel tightly against the f32 reference.
    out_f32 = self_attention(x, w, compute_dtype=jnp.float32)
    jax.block_until_ready(out_f32)
    ref_f32 = self_attention_ref(x, w)
    assert out_f32.shape == (B, S, H)
    assert jnp.allclose(out_f32, ref_f32, atol=1e-4, rtol=1e-4)

    # 2) Default bf16-MXU / f32-accumulate path: validate against the matched
    #    mixed-precision reference (standard flash-attention testing practice).
    out_bf16 = self_attention(x, w)
    jax.block_until_ready(out_bf16)
    ref_mixed = self_attention_ref_mixed(x, w)
    assert out_bf16.shape == (B, S, H)
    assert jnp.allclose(out_bf16, ref_mixed, atol=2e-2, rtol=2e-2)

    # 3) Multi-tile + non-divisible S: exercises S-padding + kv masking and the
    #    multi-step online-softmax accumulation (tile=8 -> 3 q tiles, 3 kv steps).
    S2 = 20
    x2 = jax.random.normal(jax.random.PRNGKey(1), (B, S2, H), dtype=jnp.float32)
    out2 = self_attention(x2, w, tile=8, compute_dtype=jnp.float32)
    jax.block_until_ready(out2)
    ref2 = self_attention_ref(x2, w)
    assert out2.shape == (B, S2, H)
    assert jnp.allclose(out2, ref2, atol=1e-4, rtol=1e-4)

    print("KERNEL_OK")
</pallas_src>

<mosaic_0001>
module attributes {stable_mosaic.version = 11 : i64} {
  func.func @kernel(%arg0: i32, %arg1: i32, %arg2: i32, %arg3: memref<1x8x128xf32, #tpu.memory_space<vmem>>, %arg4: memref<128x128xf32, #tpu.memory_space<vmem>>, %arg5: memref<1x8x128xf32, #tpu.memory_space<vmem>>, %arg6: memref<1x8x128xf32, #tpu.memory_space<vmem>>, %arg7: memref<8x128xf32, #tpu.memory_space<vmem>>, %arg8: memref<8x1xf32, #tpu.memory_space<vmem>>, %arg9: memref<8x1xf32, #tpu.memory_space<vmem>>, %arg10: memref<8x128xf32, #tpu.memory_space<vmem>>) attributes {dimension_semantics = [#tpu.dimension_semantics<parallel>, #tpu.dimension_semantics<parallel>, #tpu.dimension_semantics<arbitrary>], iteration_bounds = array<i64: 2, 1, 1>, scalar_prefetch = 0 : i64, scratch_operands = 4 : i64, tpu.core_type = #tpu.core_type<tc>, window_params = [{pipeline_mode = #tpu.pipeline_mode<synchronous>, transform_indices = @transform_0, window_bounds = array<i64: 1, 8, 128>}, {pipeline_mode = #tpu.pipeline_mode<synchronous>, transform_indices = @transform_1, window_bounds = array<i64: 128, 128>}, {transform_indices = @transform_2, window_bounds = array<i64: 1, 8, 128>}, {transform_indices = @transform_3, window_bounds = array<i64: 1, 8, 128>}]} {
    %c0_i32 = arith.constant 0 : i32
    %0 = arith.cmpi eq, %arg2, %c0_i32 : i32
    %1 = arith.extui %0 : i1 to i32
    %c0_i32_0 = arith.constant 0 : i32
    %2 = arith.cmpi ne, %1, %c0_i32_0 : i32
    scf.if %2 {
      %c0_22 = arith.constant 0 : index
      %c0_23 = arith.constant 0 : index
      %c0_24 = arith.constant 0 : index
      %32 = vector.load %arg3[%c0_22, %c0_23, %c0_24] : memref<1x8x128xf32, #tpu.memory_space<vmem>>, vector<1x8x128xf32>
      %33 = vector.shape_cast %32 : vector<1x8x128xf32> to vector<8x128xf32>
      %c0_25 = arith.constant 0 : index
      %c0_26 = arith.constant 0 : index
      %34 = vector.load %arg4[%c0_25, %c0_26] : memref<128x128xf32, #tpu.memory_space<vmem>>, vector<128x128xf32>
      %cst_27 = arith.constant dense<0.000000e+00> : vector<8x128xf32>
      %35 = tpu.matmul %33, %34, %cst_27 {dimension_numbers = #tpu.dot_dimension_numbers<[1], [0], [0], [1], [0, 0, 1, 1], [], []>} : vector<8x128xf32>, vector<128x128xf32>, vector<8x128xf32> -> vector<8x128xf32>
      %c0_28 = arith.constant 0 : index
      %c0_29 = arith.constant 0 : index
      %36 = vector.load %arg7[%c0_28, %c0_29] : memref<8x128xf32, #tpu.memory_space<vmem>>, vector<8x128xf32>
      tpu.vector_store %arg7[%c0_28, %c0_29], %35 {strides = array<i32>} : memref<8x128xf32, #tpu.memory_space<vmem>>, vector<8x128xf32>,
      %cst_30 = arith.constant 0xFF800000 : f32
      %37 = vector.broadcast %cst_30 : f32 to vector<8x1xf32>
      %c0_31 = arith.constant 0 : index
      %c0_32 = arith.constant 0 : index
      %38 = vector.load %arg8[%c0_31, %c0_32] : memref<8x1xf32, #tpu.memory_space<vmem>>, vector<8x1xf32>
      tpu.vector_store %arg8[%c0_31, %c0_32], %37 {strides = array<i32>} : memref<8x1xf32, #tpu.memory_space<vmem>>, vector<8x1xf32>,
      %cst_33 = arith.constant 0.000000e+00 : f32
      %39 = vector.broadcast %cst_33 : f32 to vector<8x1xf32>
      %c0_34 = arith.constant 0 : index
      %c0_35 = arith.constant 0 : index
      %40 = vector.load %arg9[%c0_34, %c0_35] : memref<8x1xf32, #tpu.memory_space<vmem>>, vector<8x1xf32>
      tpu.vector_store %arg9[%c0_34, %c0_35], %39 {strides = array<i32>} : memref<8x1xf32, #tpu.memory_space<vmem>>, vector<8x1xf32>,
      %cst_36 = arith.constant 0.000000e+00 : f32
      %41 = vector.broadcast %cst_36 : f32 to vector<8x128xf32>
      %c0_37 = arith.constant 0 : index
      %c0_38 = arith.constant 0 : index
      %42 = vector.load %arg10[%c0_37, %c0_38] : memref<8x128xf32, #tpu.memory_space<vmem>>, vector<8x128xf32>
      tpu.vector_store %arg10[%c0_37, %c0_38], %41 {strides = array<i32>} : memref<8x128xf32, #tpu.memory_space<vmem>>, vector<8x128xf32>,
    } else {
    }
    %c0 = arith.constant 0 : index
    %c0_1 = arith.constant 0 : index
    %c0_2 = arith.constant 0 : index
    %3 = vector.load %arg5[%c0, %c0_1, %c0_2] : memref<1x8x128xf32, #tpu.memory_space<vmem>>, vector<1x8x128xf32>
    %4 = vector.shape_cast %3 : vector<1x8x128xf32> to vector<8x128xf32>
    %c0_3 = arith.constant 0 : index
    %c0_4 = arith.constant 0 : index
    %5 = vector.load %arg7[%c0_3, %c0_4] : memref<8x128xf32, #tpu.memory_space<vmem>>, vector<8x128xf32>
    %cst = arith.constant dense<0.000000e+00> : vector<8x8xf32>
    %6 = tpu.matmul %5, %4, %cst {dimension_numbers = #tpu.dot_dimension_numbers<[1], [1], [0], [0], [0, 0, 1, 0], [], []>} : vector<8x128xf32>, vector<8x128xf32>, vector<8x8xf32> -> vector<8x8xf32>
    %c0_5 = arith.constant 0 : index
    %c0_6 = arith.constant 0 : index
    %7 = vector.load %arg8[%c0_5, %c0_6] : memref<8x1xf32, #tpu.memory_space<vmem>>, vector<8x1xf32>
    %cst_7 = arith.constant dense<0xFF800000> : vector<8xf32>
    %8 = vector.multi_reduction <maximumf>, %6, %cst_7 [1] : vector<8x8xf32> to vector<8xf32>
    %9 = vector.shape_cast %8 : vector<8xf32> to vector<8x1xf32>
    %10 = arith.maximumf %7, %9 : vector<8x1xf32>
    %11 = arith.subf %7, %10 : vector<8x1xf32>
    %12 = math.exp %11 : vector<8x1xf32>
    %13 = vector.broadcast %10 : vector<8x1xf32> to vector<8x8xf32>
    %14 = arith.subf %6, %13 : vector<8x8xf32>
    %15 = math.exp %14 : vector<8x8xf32>
    %c0_8 = arith.constant 0 : index
    %c0_9 = arith.constant 0 : index
    %16 = vector.load %arg9[%c0_8, %c0_9] : memref<8x1xf32, #tpu.memory_space<vmem>>, vector<8x1xf32>
    %17 = arith.mulf %12, %16 : vector<8x1xf32>
    %cst_10 = arith.constant dense<0.000000e+00> : vector<8xf32>
    %18 = vector.multi_reduction <add>, %15, %cst_10 [1] : vector<8x8xf32> to vector<8xf32>
    %19 = vector.shape_cast %18 : vector<8xf32> to vector<8x1xf32>
    %20 = arith.addf %17, %19 : vector<8x1xf32>
    %c0_11 = arith.constant 0 : index
    %c0_12 = arith.constant 0 : index
    %21 = vector.load %arg9[%c0_11, %c0_12] : memref<8x1xf32, #tpu.memory_space<vmem>>, vector<8x1xf32>
    tpu.vector_store %arg9[%c0_11, %c0_12], %20 {strides = array<i32>} : memref<8x1xf32, #tpu.memory_space<vmem>>, vector<8x1xf32>,
    %c0_13 = arith.constant 0 : index
    %c0_14 = arith.constant 0 : index
    %22 = vector.load %arg10[%c0_13, %c0_14] : memref<8x128xf32, #tpu.memory_space<vmem>>, vector<8x128xf32>
    %23 = vector.broadcast %12 : vector<8x1xf32> to vector<8x128xf32>
    %24 = arith.mulf %23, %22 : vector<8x128xf32>
    %cst_15 = arith.constant dense<0.000000e+00> : vector<8x128xf32>
    %25 = tpu.matmul %15, %4, %cst_15 {dimension_numbers = #tpu.dot_dimension_numbers<[1], [0], [0], [1], [0, 0, 1, 1], [], []>} : vector<8x8xf32>, vector<8x128xf32>, vector<8x128xf32> -> vector<8x128xf32>
    %26 = arith.addf %24, %25 : vector<8x128xf32>
    %c0_16 = arith.constant 0 : index
    %c0_17 = arith.constant 0 : index
    %27 = vector.load %arg10[%c0_16, %c0_17] : memref<8x128xf32, #tpu.memory_space<vmem>>, vector<8x128xf32>
    tpu.vector_store %arg10[%c0_16, %c0_17], %26 {strides = array<i32>} : memref<8x128xf32, #tpu.memory_space<vmem>>, vector<8x128xf32>,
    %c0_18 = arith.constant 0 : index
    %c0_19 = arith.constant 0 : index
    %28 = vector.load %arg8[%c0_18, %c0_19] : memref<8x1xf32, #tpu.memory_space<vmem>>, vector<8x1xf32>
    tpu.vector_store %arg8[%c0_18, %c0_19], %10 {strides = array<i32>} : memref<8x1xf32, #tpu.memory_space<vmem>>, vector<8x1xf32>,
    %c0_i32_20 = arith.constant 0 : i32
    %29 = arith.cmpi eq, %arg2, %c0_i32_20 : i32
    %30 = arith.extui %29 : i1 to i32
    %c0_i32_21 = arith.constant 0 : i32
    %31 = arith.cmpi ne, %30, %c0_i32_21 : i32
    scf.if %31 {
      %c0_22 = arith.constant 0 : index
      %c0_23 = arith.constant 0 : index
      %32 = vector.load %arg9[%c0_22, %c0_23] : memref<8x1xf32, #tpu.memory_space<vmem>>, vector<8x1xf32>
      %33 = tpu.reciprocal %32 : vector<8x1xf32> -> vector<8x1xf32>
      %c0_24 = arith.constant 0 : index
      %c0_25 = arith.constant 0 : index
      %34 = vector.load %arg10[%c0_24, %c0_25] : memref<8x128xf32, #tpu.memory_space<vmem>>, vector<8x128xf32>
      %35 = vector.broadcast %33 : vector<8x1xf32> to vector<8x128xf32>
      %36 = arith.mulf %34, %35 : vector<8x128xf32>
      %c0_26 = arith.constant 0 : index
      %c0_27 = arith.constant 0 : index
      %c0_28 = arith.constant 0 : index
      %37 = vector.load %arg6[%c0_26, %c0_27, %c0_28] : memref<1x8x128xf32, #tpu.memory_space<vmem>>, vector<1x8x128xf32>
      %38 = vector.shape_cast %37 : vector<1x8x128xf32> to vector<8x128xf32>
      %39 = vector.shape_cast %36 : vector<8x128xf32> to vector<1x8x128xf32>
      tpu.vector_store %arg6[%c0_26, %c0_27, %c0_28], %39 {strides = array<i32>} : memref<1x8x128xf32, #tpu.memory_space<vmem>>, vector<1x8x128xf32>,
    } else {
    }
    return
  }
  func.func @transform_0(%arg0: i32, %arg1: i32, %arg2: i32) -> (i32, i32, i32) {
    %c0_i32 = arith.constant 0 : i32
    %c0_i32_0 = arith.constant 0 : i32
    return %arg0, %arg1, %c0_i32 : i32, i32, i32
  }
  func.func @transform_1(%arg0: i32, %arg1: i32, %arg2: i32) -> (i32, i32) {
    %c0_i32 = arith.constant 0 : i32
    %c0_i32_0 = arith.constant 0 : i32
    %c0_i32_1 = arith.constant 0 : i32
    return %c0_i32, %c0_i32_0 : i32, i32
  }
  func.func @transform_2(%arg0: i32, %arg1: i32, %arg2: i32) -> (i32, i32, i32) {
    %c0_i32 = arith.constant 0 : i32
    %c0_i32_0 = arith.constant 0 : i32
    return %arg0, %arg2, %c0_i32 : i32, i32, i32
  }
  func.func @transform_3(%arg0: i32, %arg1: i32, %arg2: i32) -> (i32, i32, i32) {
    %c0_i32 = arith.constant 0 : i32
    %c0_i32_0 = arith.constant 0 : i32
    return %arg0, %arg1, %c0_i32 : i32, i32, i32
  }
}

</mosaic_0001>

<llo_original>
// kernel: tpu_custom_call.1
$region0: #{tpu_custom_call.1}
  #allocation0 [shape = 'u32[]', space=smem, size = 0x4, offset = 0x4, fixed_abs, tag = 'smem constant byte address 0x4 - core index']
  #allocation1 [shape = 'u32[144,128]{1,0:T(1,128)}', space=vmem, size = 0x12000, scoped, tag = 'internal scratch']
  #allocation2 [shape = 'f32[8,128]{1,0:T(8,128)}', space=vmem, size = 0x1000, scoped, tag = 'scratch operand']
  #allocation3 [shape = 'f32[8,1]{1,0:T(8,128)}', space=vmem, size = 0x1000, scoped, tag = 'scratch operand']
  #allocation4 [shape = 'f32[8,1]{1,0:T(8,128)}', space=vmem, size = 0x1000, scoped, tag = 'scratch operand']
  #allocation5 [shape = 'f32[8,128]{1,0:T(8,128)}', space=vmem, size = 0x1000, scoped, tag = 'scratch operand']
  %s0 = inlined_call_operand.hbm [shape: f32[2,8,128], index: 0, kind: input, shape index: {}]
  %s1 = inlined_call_operand.hbm [shape: f32[128,128], index: 1, kind: input, shape index: {}]
  %s2 = inlined_call_operand.hbm [shape: f32[2,8,128], index: 2, kind: input, shape index: {}]
  %s3 = inlined_call_operand.hbm [shape: f32[2,8,128], index: 3, kind: output, shape index: {}]
  %s4 = sld [smem:[#allocation0]]
  $region65: #{tpu_custom_call.1} parent=0
    _
  %s6 = ssub.s32 1, %s4
  %s7 = scalar_select 0, %s6, %s4
  $region1: #{tpu_custom_call.1} parent=0
    #allocation6 [shape = 'u8[4096]{0}', space=vmem, size = 0x1000, scoped, tag = 'input window, operand 0, single buffered']
    #allocation7 [shape = 's32[2]{0}', space=sflag, size = 0x8, scoped, tag = 'scoped memory for tpu_custom_call.1']
    #allocation8 [shape = 's32[2]{0}', space=sflag, size = 0x8, scoped, tag = 'scoped memory for tpu_custom_call.1']
    #allocation9 [shape = 'u8[65536]{0}', space=vmem, size = 0x10000, scoped, tag = 'input window, operand 1, single buffered']
    #allocation10 [shape = 's32[1]{0}', space=sflag, size = 0x4, scoped, tag = 'scoped memory for tpu_custom_call.1']
    #allocation11 [shape = 'u8[8192]{0}', space=vmem, size = 0x2000, scoped, tag = 'input window, operand 2']
    #allocation12 [shape = 'u8[8192]{0}', space=vmem, size = 0x2000, scoped, tag = 'output window, operand 0']
    %8 = vsyncpa [#allocation7], 0
    %9 = vsyncpa [#allocation10], 0
    %10 = vsyncpa [#allocation8], 0
    %s11 = scalar_lea.sflag [#allocation8], 1
    %12 = vsyncpa %s11, 0
    loop: start=0, step=1, limit=4
    $region2: #{tpu_custom_call.1} parent=1 // loop_pre_header
      _
    $region3: #{tpu_custom_call.1} parent=1 // loop_header
      %s14 = sphi 0, %s18
      %p15 = scmp.ge.s32.totalorder %s14, 4
      %s21 = sphi 0, %s40
      %s22 = sphi 0, %s36
      %s23 = sphi 0, %s32
      %s24 = sphi 0, %s21
      %s25 = sphi 0, %s22
      %s26 = sphi 0, %s23
      %s27 = sphi 0, %s24
      %s28 = sphi 0, %s25
      %s29 = sphi 0, %s26
      %s45 = sphi 0, %s47
      %s48 = sphi 0, %s45
      %s49 = sphi 0, %s48
      %s65 = sphi 0, %s49
      %s69 = sphi 0, %s69
      %s71 = sphi 0, %s69
      %s72 = sphi 0, %s71
      %s86 = sphi 0, %s72
      %s94 = sphi 0, %s96
      %s97 = sphi 0, %s94
      %s98 = sphi 0, %s97
      %s114 = sphi 0, %s98
      %s122 = sphi 0, %s124
      %s125 = sphi 0, %s122
      %s126 = sphi 0, %s125
      %s142 = sphi 0, %s126
    $region4: #{tpu_custom_call.1} parent=1 // loop_header_branch
      %17 = sbr.rel (%p15) target = $region8
    $region5: #{tpu_custom_call.1} parent=1 // loop_body
      %s19 = ssub.s32 %s14, 1
      %s20 = ssub.s32 %s14, 2
      %s30 = sadd.s32 1, %s23
      %p31 = scmp.ge.s32.totalorder %s30, 1
      %s32 = scalar_select %p31, 0, %s30
      %s33 = sadd.s32 1, %s22
      %s34 = scalar_select %p31, %s33, %s22
      %p35 = scmp.ge.s32.totalorder %s34, 1
      %s36 = scalar_select %p35, 0, %s34
      %s37 = sadd.s32 1, %s21
      %s38 = scalar_select %p35, %s37, %s21
      %p39 = scmp.ge.s32.totalorder %s38, 2
      %s40 = scalar_select %p39, 0, %s38
      %s41 = ssub.s32 %s21, %s40
      %s42 = ssub.s32 %s22, %s36
      %s43 = sor.u32 %s41, %s42
      %p44 = scmp.eq.s32.totalorder %s43, 0
      %s46 = sadd.s32 %s45, 1
      %s47 = scalar_select %p44, %s45, %s46
      %p50 = pneg %p44
      %p51 = scmp.eq.s32.totalorder %s14, 1
      %p52 = por %p50, %p51
      %p53 = scmp.ne.s32.totalorder %s45, %s48
      %p54 = scmp.eq.s32.totalorder %s14, 0
      %p55 = por %p53, %p54
      %p56 = scmp.ne.s32.totalorder %s45, %s48
      %p57 = scmp.eq.s32.totalorder %s19, 1
      %p58 = por %p56, %p57
      %p59 = scmp.ne.s32.totalorder %s48, %s49
      %p60 = scmp.eq.s32.totalorder %s19, 0
      %p61 = por %p59, %p60
      %p62 = scmp.ne.s32.totalorder %s48, %s49
      %p63 = scmp.eq.s32.totalorder %s20, 1
      %p64 = por %p62, %p63
      %p66 = scmp.ne.s32.totalorder %s49, %s65
      %p67 = scmp.eq.s32.totalorder %s20, 0
      %p68 = por %p66, %p67
      %s70 = sadd.s32 %s69, 1
      %p73 = scmp.eq.s32.totalorder %s14, 1
      %p74 = scmp.ne.s32.totalorder %s69, %s71
      %p75 = scmp.eq.s32.totalorder %s14, 0
      %p76 = por %p74, %p75
      %p77 = scmp.ne.s32.totalorder %s69, %s71
      %p78 = scmp.eq.s32.totalorder %s19, 1
      %p79 = por %p77, %p78
      %p80 = scmp.ne.s32.totalorder %s71, %s72
      %p81 = scmp.eq.s32.totalorder %s19, 0
      %p82 = por %p80, %p81
      %p83 = scmp.ne.s32.totalorder %s71, %s72
      %p84 = scmp.eq.s32.totalorder %s20, 1
      %p85 = por %p83, %p84
      %p87 = scmp.ne.s32.totalorder %s72, %s86
      %p88 = scmp.eq.s32.totalorder %s20, 0
      %p89 = por %p87, %p88
      %s90 = ssub.s32 %s21, %s40
      %s91 = ssub.s32 %s23, %s32
      %s92 = sor.u32 %s90, %s91
      %p93 = scmp.eq.s32.totalorder %s92, 0
      %s95 = sadd.s32 %s94, 1
      %s96 = scalar_select %p93, %s94, %s95
      %p99 = pneg %p93
      %p100 = scmp.eq.s32.totalorder %s14, 1
      %p101 = por %p99, %p100
      %p102 = scmp.ne.s32.totalorder %s94, %s97
      %p103 = scmp.eq.s32.totalorder %s14, 0
      %p104 = por %p102, %p103
      %p105 = scmp.ne.s32.totalorder %s94, %s97
      %p106 = scmp.eq.s32.totalorder %s19, 1
      %p107 = por %p105, %p106
      %p108 = scmp.ne.s32.totalorder %s97, %s98
      %p109 = scmp.eq.s32.totalorder %s19, 0
      %p110 = por %p108, %p109
      %p111 = scmp.ne.s32.totalorder %s97, %s98
      %p112 = scmp.eq.s32.totalorder %s20, 1
      %p113 = por %p111, %p112
      %p115 = scmp.ne.s32.totalorder %s98, %s114
      %p116 = scmp.eq.s32.totalorder %s20, 0
      %p117 = por %p115, %p116
      %s118 = ssub.s32 %s21, %s40
      %s119 = ssub.s32 %s22, %s36
      %s120 = sor.u32 %s118, %s119
      %p121 = scmp.eq.s32.totalorder %s120, 0
      %s123 = sadd.s32 %s122, 1
      %s124 = scalar_select %p121, %s122, %s123
      %p127 = pneg %p121
      %p128 = scmp.eq.s32.totalorder %s14, 1
      %p129 = por %p127, %p128
      %p130 = scmp.ne.s32.totalorder %s122, %s125
      %p131 = scmp.eq.s32.totalorder %s14, 0
      %p132 = por %p130, %p131
      %p133 = scmp.ne.s32.totalorder %s122, %s125
      %p134 = scmp.eq.s32.totalorder %s19, 1
      %p135 = por %p133, %p134
      %p136 = scmp.ne.s32.totalorder %s125, %s126
      %p137 = scmp.eq.s32.totalorder %s19, 0
      %p138 = por %p136, %p137
      %p139 = scmp.ne.s32.totalorder %s125, %s126
      %p140 = scmp.eq.s32.totalorder %s20, 1
      %p141 = por %p139, %p140
      %p143 = scmp.ne.s32.totalorder %s126, %s142
      %p144 = scmp.eq.s32.totalorder %s20, 0
      %p145 = por %p143, %p144
      %p146 = scmp.le.s32.totalorder 1, %s14
      %p147 = scmp.lt.s32.totalorder %s14, 3
      %p148 = pnand %p146, %p147
      %p149 = pneg %p148
      // Predicated region
      $region9: #{tpu_custom_call.1} parent=5 // pred_check
        _
      $region10: #{tpu_custom_call.1} parent=5 // pred_check_branch
        %151 = sbr.rel (%p148) target = $region12
      $region11: #{tpu_custom_call.1} parent=5 // pred_region
        %s152 = ssub.s32 %s14, 1
        // Predicated region
        $region13: #{tpu_custom_call.1} parent=11 // pred_check
          %p153 = pneg %p61
        $region14: #{tpu_custom_call.1} parent=11 // pred_check_branch
          %155 = sbr.rel (%p153) target = $region16
        $region15: #{tpu_custom_call.1} parent=11 // pred_region
          %s157 = ssub.s32 128, 128
          %158 = vsyncadd [#allocation7], %s157
          %s159 = sadd.s32 %s25, %s24
          %s160 = smul.addr %s159, 128
          %s161 = scalar_lea.hbm %s0, %s160
          %s163 = sshll.u32 [#allocation6], 4
          %s164 = int_to_ptr.vmem [resolvable:$true] %s163
          %166 = dma.hbm_to_vmem [thread:$0]  %s161, 128, %s164, [#allocation7]
        $region16: #{tpu_custom_call.1} parent=11 // pred_fallthru
          _
        // Predicated region
        $region17: #{tpu_custom_call.1} parent=11 // pred_check
          %p167 = pneg %p82
        $region18: #{tpu_custom_call.1} parent=11 // pred_check_branch
          %169 = sbr.rel (%p167) target = $region20
        $region19: #{tpu_custom_call.1} parent=11 // pred_region
          %s171 = ssub.s32 2048, 2048
          %172 = vsyncadd [#allocation10], %s171
          %s173 = sshll.u32 [#allocation9], 4
          %s174 = int_to_ptr.vmem [resolvable:$true] %s173
          %179 = dma.hbm_to_vmem [thread:$0]  %s1, 2048, %s174, [#allocation10], 128, 128, 8
        $region20: #{tpu_custom_call.1} parent=11 // pred_fallthru
          _
      $region12: #{tpu_custom_call.1} parent=5 // pred_fallthru
        _
      %p180 = scmp.lt.s32.totalorder %s14, 2
      // Predicated region
      $region21: #{tpu_custom_call.1} parent=5 // pred_check
        %p181 = pneg %p180
      $region22: #{tpu_custom_call.1} parent=5 // pred_check_branch
        %183 = sbr.rel (%p181) target = $region24
      $region23: #{tpu_custom_call.1} parent=5 // pred_region
        // Predicated region
        $region25: #{tpu_custom_call.1} parent=23 // pred_check
          %p184 = pneg %p104
        $region26: #{tpu_custom_call.1} parent=23 // pred_check_branch
          %186 = sbr.rel (%p184) target = $region28
        $region27: #{tpu_custom_call.1} parent=23 // pred_region
          %s187 = sand.u32 %s14, 1
          %s188 = scalar_lea.sflag [#allocation7], %s187
          %s189 = sand.u32 %s94, 1
          %s190 = smul.addr %s189, 8
          %s191 = scalar_lea.vmem [#allocation11], %s190
          %s193 = ssub.s32 128, 128
          %194 = vsyncadd %s188, %s193
          %s195 = sadd.s32 %s23, %s21
          %s196 = smul.addr %s195, 128
          %s197 = scalar_lea.hbm %s2, %s196
          %s199 = sshll.u32 %s191, 4
          %s200 = int_to_ptr.vmem [resolvable:$true] %s199
          %202 = dma.hbm_to_vmem [thread:$0]  %s197, 128, %s200, %s188
        $region28: #{tpu_custom_call.1} parent=23 // pred_fallthru
          _
      $region24: #{tpu_custom_call.1} parent=5 // pred_fallthru
        _
      %p203 = scmp.le.s32.totalorder 1, %s14
      %p204 = scmp.lt.s32.totalorder %s14, 3
      %p205 = pnand %p203, %p204
      %p206 = pneg %p205
      // Predicated region
      $region29: #{tpu_custom_call.1} parent=5 // pred_check
        _
      $region30: #{tpu_custom_call.1} parent=5 // pred_check_branch
        %208 = sbr.rel (%p205) target = $region32
      $region31: #{tpu_custom_call.1} parent=5 // pred_region
        %s209 = ssub.s32 %s14, 1
        // Predicated region
        $region33: #{tpu_custom_call.1} parent=31 // pred_check
          %p210 = pneg %p61
        $region34: #{tpu_custom_call.1} parent=31 // pred_check_branch
          %212 = sbr.rel (%p210) target = $region36
        $region35: #{tpu_custom_call.1} parent=31 // pred_region
          %213 = dma.done [#allocation7], 128
        $region36: #{tpu_custom_call.1} parent=31 // pred_fallthru
          _
        // Predicated region
        $region37: #{tpu_custom_call.1} parent=31 // pred_check
          %p214 = pneg %p82
        $region38: #{tpu_custom_call.1} parent=31 // pred_check_branch
          %216 = sbr.rel (%p214) target = $region40
        $region39: #{tpu_custom_call.1} parent=31 // pred_region
          %217 = dma.done [#allocation10], 2048
        $region40: #{tpu_custom_call.1} parent=31 // pred_fallthru
          _
        %s218 = sand.u32 %s19, 1
        %s219 = scalar_lea.sflag [#allocation7], %s218
        %s220 = sand.u32 %s97, 1
        %s221 = smul.addr %s220, 8
        %s222 = scalar_lea.vmem [#allocation11], %s221
        // Predicated region
        $region41: #{tpu_custom_call.1} parent=31 // pred_check
          %p223 = pneg %p110
        $region42: #{tpu_custom_call.1} parent=31 // pred_check_branch
          %225 = sbr.rel (%p223) target = $region44
        $region43: #{tpu_custom_call.1} parent=31 // pred_region
          %226 = dma.done %s219, 128
        $region44: #{tpu_custom_call.1} parent=31 // pred_fallthru
          _
        %p227 = pneg %p61
        %p228 = pneg %p58
        %p229 = pneg %p82
        %p230 = pneg %p79
        %s231 = sand.u32 %s19, 1
        %s232 = scalar_lea.sflag [#allocation7], %s231
        %s233 = sand.u32 %s97, 1
        %s234 = smul.addr %s233, 8
        %s235 = scalar_lea.vmem [#allocation11], %s234
        %p236 = pneg %p110
        %p237 = pneg %p107
        %p238 = pneg %p138
        %p239 = pneg %p135
        %s240 = sand.u32 %s125, 1
        %s241 = scalar_lea.sflag [#allocation8], %s240
        %s242 = sand.u32 %s125, 1
        %s243 = smul.addr %s242, 8
        %s244 = scalar_lea.vmem [#allocation12], %s243
        %p245 = scmp.eq.s32.totalorder %s26, 0
        // Predicated region
        $region45: #{tpu_custom_call.1} parent=31 // pred_check
          %p246 = pneg %p245
        $region46: #{tpu_custom_call.1} parent=31 // pred_check_branch
          %248 = sbr.rel (%p246) target = $region48
        $region47: #{tpu_custom_call.1} parent=31 // pred_region
          %v249 = vld [vmem:[#allocation6] sm:$0xff]
          %v250 = vld [vmem:[#allocation9] sm:$0xff]
          %v251 = vld [vmem:[#allocation9 + $0x8] sm:$0xff]
          %v252 = vld [vmem:[#allocation9 + $0x10] sm:$0xff]
          %v253 = vld [vmem:[#allocation9 + $0x18] sm:$0xff]
          %v254 = vld [vmem:[#allocation9 + $0x20] sm:$0xff]
          %v255 = vld [vmem:[#allocation9 + $0x28] sm:$0xff]
          %v256 = vld [vmem:[#allocation9 + $0x30] sm:$0xff]
          %v257 = vld [vmem:[#allocation9 + $0x38] sm:$0xff]
          %v258 = vld [vmem:[#allocation9 + $0x40] sm:$0xff]
          %v259 = vld [vmem:[#allocation9 + $0x48] sm:$0xff]
          %v260 = vld [vmem:[#allocation9 + $0x50] sm:$0xff]
          %v261 = vld [vmem:[#allocation9 + $0x58] sm:$0xff]
          %v262 = vld [vmem:[#allocation9 + $0x60] sm:$0xff]
          %v263 = vld [vmem:[#allocation9 + $0x68] sm:$0xff]
          %v264 = vld [vmem:[#allocation9 + $0x70] sm:$0xff]
          %v265 = vld [vmem:[#allocation9 + $0x78] sm:$0xff]
          %266 = vmatprep.subr.mxu0 0.0
          %267 = vmatpush1.msra.mxu0 %v265
          %268 = vmatprep.subr.mxu0 0.0
          %269 = vmatpush1.msra.mxu0 %v264
          %270 = vmatprep.subr.mxu0 0.0
          %271 = vmatpush1.msra.mxu0 %v263
          %272 = vmatprep.subr.mxu0 0.0
          %273 = vmatpush1.msra.mxu0 %v262
          %274 = vmatprep.subr.mxu0 0.0
          %275 = vmatpush1.msra.mxu0 %v261
          %276 = vmatprep.subr.mxu0 0.0
          %277 = vmatpush1.msra.mxu0 %v260
          %278 = vmatprep.subr.mxu0 0.0
          %279 = vmatpush1.msra.mxu0 %v259
          %280 = vmatprep.subr.mxu0 0.0
          %281 = vmatpush1.msra.mxu0 %v258
          %282 = vmatprep.subr.mxu0 0.0
          %283 = vmatpush1.msra.mxu0 %v257
          %284 = vmatprep.subr.mxu0 0.0
          %285 = vmatpush1.msra.mxu0 %v256
          %286 = vmatprep.subr.mxu0 0.0
          %287 = vmatpush1.msra.mxu0 %v255
          %288 = vmatprep.subr.mxu0 0.0
          %289 = vmatpush1.msra.mxu0 %v254
          %290 = vmatprep.subr.mxu0 0.0
          %291 = vmatpush1.msra.mxu0 %v253
          %292 = vmatprep.subr.mxu0 0.0
          %293 = vmatpush1.msra.mxu0 %v252
          %294 = vmatprep.subr.mxu0 0.0
          %295 = vmatpush1.msra.mxu0 %v251
          %296 = vmatprep.subr.mxu0 0.0
          %297 = vmatpush1.msra.mxu0 %v250
          %298 = vmatprep.subr.mxu0 0.0
          %299 = vmatpush2.msra.mxu0 0.0
          %300 = vmatprep.subr.mxu0 0.0
          %301 = vmatpush2.msra.mxu0 0.0
          %302 = vmatprep.subr.mxu0 0.0
          %303 = vmatpush2.msra.mxu0 0.0
          %304 = vmatprep.subr.mxu0 0.0
          %305 = vmatpush2.msra.mxu0 0.0
          %306 = vmatprep.subr.mxu0 0.0
          %307 = vmatpush2.msra.mxu0 0.0
          %308 = vmatprep.subr.mxu0 0.0
          %309 = vmatpush2.msra.mxu0 0.0
          %310 = vmatprep.subr.mxu0 0.0
          %311 = vmatpush2.msra.mxu0 0.0
          %312 = vmatprep.subr.mxu0 0.0
          %313 = vmatpush2.msra.mxu0 0.0
          %314 = vmatprep.subr.mxu0 0.0
          %315 = vmatpush2.msra.mxu0 0.0
          %316 = vmatprep.subr.mxu0 0.0
          %317 = vmatpush2.msra.mxu0 0.0
          %318 = vmatprep.subr.mxu0 0.0
          %319 = vmatpush2.msra.mxu0 0.0
          %320 = vmatprep.subr.mxu0 0.0
          %321 = vmatpush2.msra.mxu0 0.0
          %322 = vmatprep.subr.mxu0 0.0
          %323 = vmatpush2.msra.mxu0 0.0
          %324 = vmatprep.subr.mxu0 0.0
          %325 = vmatpush2.msra.mxu0 0.0
          %326 = vmatprep.subr.mxu0 0.0
          %327 = vmatpush2.msra.mxu0 0.0
          %328 = vmatprep.subr.mxu0 0.0
          %329 = vmatpush2.msra.mxu0 0.0
          %330 = vmatprep.mubr.f32.mxu0 0.0
          %331 = vmatmul.mubr.f32.gmra.mxu0 %v249
          %v332 = vpop.f32.mrf.mxu0
          %v333 = vadd.f32 0.0, %v332
          %v334 = vpop.f32.mrf.mxu0
          %335 = vdwg.mxu0
          %336 = vst [vmem:[#allocation2] sm:$0xff] %v333
          %vm337 = vcmask 7168
          %338 = vst.msk [vmem:[#allocation3] sm:$0xff] %vm337, -inf
          %339 = vst.msk [vmem:[#allocation4] sm:$0xff] %vm337, 0.0
          %340 = vst [vmem:[#allocation5] sm:$0xff] 0.0
        $region48: #{tpu_custom_call.1} parent=31 // pred_fallthru
          _
        %v341 = vld [vmem:[%s222] sm:$0xff]
        %v342 = vld [vmem:[#allocation2] sm:$0xff]
        %343 = vmatprep.subr.mxu0 0.0
        %344 = vmatpush1.xpose.msra.mxu0 0.0
        %345 = vmatprep.subr.mxu0 0.0
        %346 = vmatpush1.xpose.msra.mxu0 0.0
        %347 = vmatprep.subr.mxu0 0.0
        %348 = vmatpush1.xpose.msra.mxu0 0.0
        %349 = vmatprep.subr.mxu0 0.0
        %350 = vmatpush1.xpose.msra.mxu0 0.0
        %351 = vmatprep.subr.mxu0 0.0
        %352 = vmatpush1.xpose.msra.mxu0 0.0
        %353 = vmatprep.subr.mxu0 0.0
        %354 = vmatpush1.xpose.msra.mxu0 0.0
        %355 = vmatprep.subr.mxu0 0.0
        %356 = vmatpush1.xpose.msra.mxu0 0.0
        %357 = vmatprep.subr.mxu0 0.0
        %358 = vmatpush1.xpose.msra.mxu0 0.0
        %359 = vmatprep.subr.mxu0 0.0
        %360 = vmatpush1.xpose.msra.mxu0 0.0
        %361 = vmatprep.subr.mxu0 0.0
        %362 = vmatpush1.xpose.msra.mxu0 0.0
        %363 = vmatprep.subr.mxu0 0.0
        %364 = vmatpush1.xpose.msra.mxu0 0.0
        %365 = vmatprep.subr.mxu0 0.0
        %366 = vmatpush1.xpose.msra.mxu0 0.0
        %367 = vmatprep.subr.mxu0 0.0
        %368 = vmatpush1.xpose.msra.mxu0 0.0
        %369 = vmatprep.subr.mxu0 0.0
        %370 = vmatpush1.xpose.msra.mxu0 0.0
        %371 = vmatprep.subr.mxu0 0.0
        %372 = vmatpush1.xpose.msra.mxu0 0.0
        %373 = vmatprep.subr.mxu0 0.0
        %374 = vmatpush1.xpose.msra.mxu0 %v341
        %375 = vmatprep.subr.mxu0 0.0
        %376 = vmatpush2.xpose.msra.mxu0 0.0
        %377 = vmatprep.subr.mxu0 0.0
        %378 = vmatpush2.xpose.msra.mxu0 0.0
        %379 = vmatprep.subr.mxu0 0.0
        %380 = vmatpush2.xpose.msra.mxu0 0.0
        %381 = vmatprep.subr.mxu0 0.0
        %382 = vmatpush2.xpose.msra.mxu0 0.0
        %383 = vmatprep.subr.mxu0 0.0
        %384 = vmatpush2.xpose.msra.mxu0 0.0
        %385 = vmatprep.subr.mxu0 0.0
        %386 = vmatpush2.xpose.msra.mxu0 0.0
        %387 = vmatprep.subr.mxu0 0.0
        %388 = vmatpush2.xpose.msra.mxu0 0.0
        %389 = vmatprep.subr.mxu0 0.0
        %390 = vmatpush2.xpose.msra.mxu0 0.0
        %391 = vmatprep.subr.mxu0 0.0
        %392 = vmatpush2.xpose.msra.mxu0 0.0
        %393 = vmatprep.subr.mxu0 0.0
        %394 = vmatpush2.xpose.msra.mxu0 0.0
        %395 = vmatprep.subr.mxu0 0.0
        %396 = vmatpush2.xpose.msra.mxu0 0.0
        %397 = vmatprep.subr.mxu0 0.0
        %398 = vmatpush2.xpose.msra.mxu0 0.0
        %399 = vmatprep.subr.mxu0 0.0
        %400 = vmatpush2.xpose.msra.mxu0 0.0
        %401 = vmatprep.subr.mxu0 0.0
        %402 = vmatpush2.xpose.msra.mxu0 0.0
        %403 = vmatprep.subr.mxu0 0.0
        %404 = vmatpush2.xpose.msra.mxu0 0.0
        %405 = vmatprep.subr.mxu0 0.0
        %406 = vmatpush2.xpose.msra.mxu0 0.0
        %407 = vmatprep.mubr.f32.mxu0 0.0
        %408 = vmatmul.mubr.f32.gmra.mxu0 %v342
        %v409 = vpop.f32.mrf.mxu0
        %v410 = vadd.f32 0.0, %v409
        %v411 = vpop.f32.mrf.mxu0
        %412 = vdwg.mxu0
        %v413 = vld [vmem:[#allocation3] sm:$0xff]
        %vm414 = vcmask 64512
        %v415 = vsel %vm414, %v410, -inf
        %416 = vmax.xlane.f32.xlu0 %v415
        %v417 = vpop.xlane.xlu0 %416
        %v418 = vmax.f32 %v413, %v417
        %v419 = vsub.f32 %v413, %v418
        %v420 = vmul.f32 %v419, 1.442695
        %v421 = vpow.pop %v420
        %423 = vset.pattern.permute.xlu0 0
        %424 = vperm.xlu0 %423, %v418
        %v425 = vpop.permute.xlu0 %424
        %v427 = vsub.f32 %v410, %v425
        %v428 = vmul.f32 %v427, 1.442695
        %v429 = vpow.pop %v428
        %v430 = vld [vmem:[#allocation4] sm:$0xff]
        %v431 = vmul.f32 %v421, %v430
        %v432 = vsel %vm414, %v429, 0.0
        %433 = vadd.xlane.f32.xlu0 %v432
        %v434 = vpop.xlane.xlu0 %433
        %v435 = vadd.f32 %v431, %v434
        %vm436 = vcmask 7168
        %437 = vst.msk [vmem:[#allocation4] sm:$0xff] %vm436, %v435
        %v438 = vld [vmem:[#allocation5] sm:$0xff]
        %440 = vset.pattern.permute.xlu0 0
        %441 = vperm.xlu0 %440, %v421
        %v442 = vpop.permute.xlu0 %441
        %v444 = vmul.f32 %v442, %v438
        %v446 = vsel %vm414, %v429, 0
        %448 = vmatprep.subr.mxu0 0.0
        %449 = vmatpush1.msra.mxu0 0.0
        %450 = vmatprep.subr.mxu0 0.0
        %451 = vmatpush1.msra.mxu0 0.0
        %452 = vmatprep.subr.mxu0 0.0
        %453 = vmatpush1.msra.mxu0 0.0
        %454 = vmatprep.subr.mxu0 0.0
        %455 = vmatpush1.msra.mxu0 0.0
        %456 = vmatprep.subr.mxu0 0.0
        %457 = vmatpush1.msra.mxu0 0.0
        %458 = vmatprep.subr.mxu0 0.0
        %459 = vmatpush1.msra.mxu0 0.0
        %460 = vmatprep.subr.mxu0 0.0
        %461 = vmatpush1.msra.mxu0 0.0
        %462 = vmatprep.subr.mxu0 0.0
        %463 = vmatpush1.msra.mxu0 0.0
        %464 = vmatprep.subr.mxu0 0.0
        %465 = vmatpush1.msra.mxu0 0.0
        %466 = vmatprep.subr.mxu0 0.0
        %467 = vmatpush1.msra.mxu0 0.0
        %468 = vmatprep.subr.mxu0 0.0
        %469 = vmatpush1.msra.mxu0 0.0
        %470 = vmatprep.subr.mxu0 0.0
        %471 = vmatpush1.msra.mxu0 0.0
        %472 = vmatprep.subr.mxu0 0.0
        %473 = vmatpush1.msra.mxu0 0.0
        %474 = vmatprep.subr.mxu0 0.0
        %475 = vmatpush1.msra.mxu0 0.0
        %476 = vmatprep.subr.mxu0 0.0
        %477 = vmatpush1.msra.mxu0 0.0
        %478 = vmatprep.subr.mxu0 0.0
        %479 = vmatpush1.msra.mxu0 %v341
        %480 = vmatprep.subr.mxu0 0.0
        %481 = vmatpush2.msra.mxu0 0.0
        %482 = vmatprep.subr.mxu0 0.0
        %483 = vmatpush2.msra.mxu0 0.0
        %484 = vmatprep.subr.mxu0 0.0
        %485 = vmatpush2.msra.mxu0 0.0
        %486 = vmatprep.subr.mxu0 0.0
        %487 = vmatpush2.msra.mxu0 0.0
        %488 = vmatprep.subr.mxu0 0.0
        %489 = vmatpush2.msra.mxu0 0.0
        %490 = vmatprep.subr.mxu0 0.0
        %491 = vmatpush2.msra.mxu0 0.0
        %492 = vmatprep.subr.mxu0 0.0
        %493 = vmatpush2.msra.mxu0 0.0
        %494 = vmatprep.subr.mxu0 0.0
        %495 = vmatpush2.msra.mxu0 0.0
        %496 = vmatprep.subr.mxu0 0.0
        %497 = vmatpush2.msra.mxu0 0.0
        %498 = vmatprep.subr.mxu0 0.0
        %499 = vmatpush2.msra.mxu0 0.0
        %500 = vmatprep.subr.mxu0 0.0
        %501 = vmatpush2.msra.mxu0 0.0
        %502 = vmatprep.subr.mxu0 0.0
        %503 = vmatpush2.msra.mxu0 0.0
        %504 = vmatprep.subr.mxu0 0.0
        %505 = vmatpush2.msra.mxu0 0.0
        %506 = vmatprep.subr.mxu0 0.0
        %507 = vmatpush2.msra.mxu0 0.0
        %508 = vmatprep.subr.mxu0 0.0
        %509 = vmatpush2.msra.mxu0 0.0
        %510 = vmatprep.subr.mxu0 0.0
        %511 = vmatpush2.msra.mxu0 0.0
        %512 = vmatprep.mubr.f32.mxu0 0.0
        %513 = vmatmul.mubr.f32.gmra.mxu0 %v446
        %v514 = vpop.f32.mrf.mxu0
        %v515 = vadd.f32 0.0, %v514
        %v516 = vpop.f32.mrf.mxu0
        %517 = vdwg.mxu0
        %v518 = vadd.f32 %v444, %v515
        %519 = vst [vmem:[#allocation5] sm:$0xff] %v518
        %520 = vst.msk [vmem:[#allocation3] sm:$0xff] %vm436, %v418
        // Predicated region
        $region49: #{tpu_custom_call.1} parent=31 // pred_check
          %p521 = pneg %p245
        $region50: #{tpu_custom_call.1} parent=31 // pred_check_branch
          %523 = sbr.rel (%p521) target = $region52
        $region51: #{tpu_custom_call.1} parent=31 // pred_region
          %v524 = vld [vmem:[#allocation4] sm:$0xff]
          %v525 = vrcp.pop %v524
          %v526 = vld [vmem:[#allocation5] sm:$0xff]
          %528 = vset.pattern.permute.xlu0 0
          %529 = vperm.xlu0 %528, %v525
          %v530 = vpop.permute.xlu0 %529
          %v532 = vmul.f32 %v526, %v530
          %533 = vst [vmem:[%s244] sm:$0xff] %v532
        $region52: #{tpu_custom_call.1} parent=31 // pred_fallthru
          _
        %s534 = sand.u32 %s125, 1
        %s535 = scalar_lea.sflag [#allocation8], %s534
        %s536 = sand.u32 %s125, 1
        %s537 = smul.addr %s536, 8
        %s538 = scalar_lea.vmem [#allocation12], %s537
        // Predicated region
        $region53: #{tpu_custom_call.1} parent=31 // pred_check
          %p539 = pneg %p135
        $region54: #{tpu_custom_call.1} parent=31 // pred_check_branch
          %541 = sbr.rel (%p539) target = $region56
        $region55: #{tpu_custom_call.1} parent=31 // pred_region
          %s543 = ssub.s32 128, 128
          %544 = vsyncadd %s535, %s543
          %s545 = sadd.s32 %s25, %s24
          %s546 = smul.addr %s545, 128
          %s547 = scalar_lea.hbm %s3, %s546
          %s549 = sshll.u32 %s538, 4
          %s550 = int_to_ptr.vmem [resolvable:$true] %s549
          %552 = dma.vmem_to_hbm [thread:$0]  %s550, 128, %s547, %s535
        $region56: #{tpu_custom_call.1} parent=31 // pred_fallthru
          _
      $region32: #{tpu_custom_call.1} parent=5 // pred_fallthru
        _
      %p553 = scmp.le.s32.totalorder 2, %s14
      // Predicated region
      $region57: #{tpu_custom_call.1} parent=5 // pred_check
        %p554 = pneg %p553
      $region58: #{tpu_custom_call.1} parent=5 // pred_check_branch
        %556 = sbr.rel (%p554) target = $region60
      $region59: #{tpu_custom_call.1} parent=5 // pred_region
        %s557 = ssub.s32 %s14, 2
        // Predicated region
        $region61: #{tpu_custom_call.1} parent=59 // pred_check
          %p558 = pneg %p141
        $region62: #{tpu_custom_call.1} parent=59 // pred_check_branch
          %560 = sbr.rel (%p558) target = $region64
        $region63: #{tpu_custom_call.1} parent=59 // pred_region
          %s561 = sand.u32 %s126, 1
          %s562 = scalar_lea.sflag [#allocation8], %s561
          %s563 = sand.u32 %s126, 1
          %s564 = smul.addr %s563, 8
          %s565 = scalar_lea.vmem [#allocation12], %s564
          %566 = dma.done %s562, 128
        $region64: #{tpu_custom_call.1} parent=59 // pred_fallthru
          _
      $region60: #{tpu_custom_call.1} parent=5 // pred_fallthru
        _
    $region6: #{tpu_custom_call.1} parent=1 // loop_footer
      %s18 = sadd.s32 1, %s14
    $region7: #{tpu_custom_call.1} parent=1 // loop_footer_branch
      %13 = sbr.rel target = $region3
    $region8: #{tpu_custom_call.1} parent=1 // loop_exit
      _
    %567 = vsyncpa [#allocation7], 1
    %s568 = scalar_lea.sflag [#allocation7], 1
    %569 = vsyncpa %s568, 1
    %570 = vsyncpa [#allocation10], 1
    %571 = vsyncpa [#allocation8], 1
    %s572 = scalar_lea.sflag [#allocation8], 1
    %573 = vsyncpa %s572, 1

</llo_original>
